<compile_context>
chip_gen: v5e
topology: v5e:2x2
jax: 0.10.0
libtpu: 0.0.40
codegen_flags: <defaults>
</compile_context>

<pallas_src>
import jax
import jax.numpy as jnp
from jax.experimental import pallas as pl
from jax.experimental.pallas import tpu as pltpu

LATENT = 10
HIDDEN = 30
OBS = 50
OUT = 2 * OBS          # 100 real output columns
OUT_PAD = 128          # lane-dense padded output width
MAX_TILE_M = 1024      # rows per grid step (VMEM per buffer < 1 MiB)


def _softplus(x):
    # Numerically stable softplus, matches torch.nn.Softplus (beta=1, f32).
    return jnp.maximum(x, 0.0) + jnp.log1p(jnp.exp(-jnp.abs(x)))


def decoder_kernel(x_ref, w1_ref, b1_ref, w2_ref, b2_ref, w3_ref, b3_ref,
                   out_ref):
    x = x_ref[...]                                             # [TILE_M, 10]
    h1 = jnp.dot(x, w1_ref[...],
                 preferred_element_type=jnp.float32) + b1_ref[...]
    h1 = _softplus(h1)                                         # [TILE_M, 30]
    h2 = jnp.dot(h1, w2_ref[...],
                 preferred_element_type=jnp.float32) + b2_ref[...]
    h2 = _softplus(h2)                                         # [TILE_M, 30]
    # Single lane-dense output matmul (columns 100..127 are zero padding).
    out_ref[...] = jnp.dot(h2, w3_ref[...],
                           preferred_element_type=jnp.float32) + b3_ref[...]


@jax.jit
def decoder_forward(z, params):
    """z: [seq_len, batch, 10] -> (px_mean, px_logstd): [seq_len, batch, 50]."""
    seq_len, batch, latent = z.shape
    assert latent == LATENT
    m = seq_len * batch

    # Row tile: multiple of 8 sublanes; pad M so every DMA / store is
    # full-width and unmasked.
    if m >= MAX_TILE_M:
        tile_m = MAX_TILE_M
    else:
        tile_m = max(8, ((m + 7) // 8) * 8)
    m_pad = pl.cdiv(m, tile_m) * tile_m

    x = z.reshape(m, LATENT).astype(jnp.float32)
    if m_pad != m:
        x = jnp.pad(x, ((0, m_pad - m), (0, 0)))

    w1, b1, w2, b2, w3, b3 = (params[k] for k in
                              ("w1", "b1", "w2", "b2", "w3", "b3"))
    # Zero-pad the last layer to 128 output lanes (tiny, done by XLA outside
    # the kernel; constant-folded across steps inside jit).
    w3p = jnp.pad(w3, ((0, 0), (0, OUT_PAD - OUT)))
    b3p = jnp.pad(b3, ((0, 0), (0, OUT_PAD - OUT)))

    resident = lambda shape: pl.BlockSpec(shape, lambda i: (0, 0))
    grid = (m_pad // tile_m,)

    out = pl.pallas_call(
        decoder_kernel,
        out_shape=jax.ShapeDtypeStruct((m_pad, OUT_PAD), jnp.float32),
        grid=grid,
        in_specs=[
            pl.BlockSpec((tile_m, LATENT), lambda i: (i, 0)),   # x row tile
            resident((LATENT, HIDDEN)),                         # w1
            resident((1, HIDDEN)),                              # b1
            resident((HIDDEN, HIDDEN)),                         # w2
            resident((1, HIDDEN)),                              # b2
            resident((HIDDEN, OUT_PAD)),                        # w3 (padded)
            resident((1, OUT_PAD)),                             # b3 (padded)
        ],
        out_specs=pl.BlockSpec((tile_m, OUT_PAD), lambda i: (i, 0)),
        compiler_params=pltpu.CompilerParams(
            dimension_semantics=("parallel",)),
    )(x, w1, b1, w2, b2, w3p, b3p)

    mean = out[:m, :OBS].reshape(seq_len, batch, OBS)
    logstd = out[:m, OBS:OUT].reshape(seq_len, batch, OBS)
    return mean, logstd


def init_params(key):
    """Deterministic init mimicking nn.Linear default (U[-1/sqrt(fan_in), +])."""
    ks = jax.random.split(key, 6)

    def lin(kw, kb, fan_in, fan_out):
        bound = 1.0 / jnp.sqrt(fan_in)
        w = jax.random.uniform(kw, (fan_in, fan_out), jnp.float32, -bound, bound)
        b = jax.random.uniform(kb, (1, fan_out), jnp.float32, -bound, bound)
        return w, b

    w1, b1 = lin(ks[0], ks[1], LATENT, HIDDEN)
    w2, b2 = lin(ks[2], ks[3], HIDDEN, HIDDEN)
    w3, b3 = lin(ks[4], ks[5], HIDDEN, OUT)
    return {"w1": w1, "b1": b1, "w2": w2, "b2": b2, "w3": w3, "b3": b3}


def _reference(z, params):
    h = _softplus(z @ params["w1"] + params["b1"])
    h = _softplus(h @ params["w2"] + params["b2"])
    out = h @ params["w3"] + params["b3"]
    return out[..., :OBS], out[..., OBS:]


if __name__ == "__main__":
    key = jax.random.PRNGKey(0)
    kz, kp = jax.random.split(key)

    seq_len, batch = 8, 2
    z = jax.random.normal(kz, (seq_len, batch, LATENT), dtype=jnp.float32)
    params = init_params(kp)

    px_mean, px_logstd = decoder_forward(z, params)
    jax.block_until_ready((px_mean, px_logstd))

    # sanity check against plain-JAX reference
    ref_mean, ref_logstd = _reference(z, params)
    assert px_mean.shape == (seq_len, batch, OBS)
    assert px_logstd.shape == (seq_len, batch, OBS)
    assert jnp.allclose(px_mean, ref_mean, atol=1e-5, rtol=1e-5)
    assert jnp.allclose(px_logstd, ref_logstd, atol=1e-5, rtol=1e-5)

    print("KERNEL_OK")
</pallas_src>

<mosaic_0001>
module attributes {stable_mosaic.version = 11 : i64} {
  func.func @decoder_kernel(%arg0: i32, %arg1: memref<16x10xf32, #tpu.memory_space<vmem>>, %arg2: memref<10x30xf32, #tpu.memory_space<vmem>>, %arg3: memref<1x30xf32, #tpu.memory_space<vmem>>, %arg4: memref<30x30xf32, #tpu.memory_space<vmem>>, %arg5: memref<1x30xf32, #tpu.memory_space<vmem>>, %arg6: memref<30x128xf32, #tpu.memory_space<vmem>>, %arg7: memref<1x128xf32, #tpu.memory_space<vmem>>, %arg8: memref<16x128xf32, #tpu.memory_space<vmem>>) attributes {dimension_semantics = [#tpu.dimension_semantics<parallel>], iteration_bounds = array<i64: 1>, scalar_prefetch = 0 : i64, scratch_operands = 0 : i64, tpu.core_type = #tpu.core_type<tc>, window_params = [{transform_indices = @transform_0, window_bounds = array<i64: 16, 10>}, {pipeline_mode = #tpu.pipeline_mode<synchronous>, transform_indices = @transform_1, window_bounds = array<i64: 10, 30>}, {pipeline_mode = #tpu.pipeline_mode<synchronous>, transform_indices = @transform_2, window_bounds = array<i64: 1, 30>}, {pipeline_mode = #tpu.pipeline_mode<synchronous>, transform_indices = @transform_3, window_bounds = array<i64: 30, 30>}, {pipeline_mode = #tpu.pipeline_mode<synchronous>, transform_indices = @transform_4, window_bounds = array<i64: 1, 30>}, {pipeline_mode = #tpu.pipeline_mode<synchronous>, transform_indices = @transform_5, window_bounds = array<i64: 30, 128>}, {pipeline_mode = #tpu.pipeline_mode<synchronous>, transform_indices = @transform_6, window_bounds = array<i64: 1, 128>}, {transform_indices = @transform_7, window_bounds = array<i64: 16, 128>}]} {
    %c0 = arith.constant 0 : index
    %c0_0 = arith.constant 0 : index
    %0 = vector.load %arg1[%c0, %c0_0] : memref<16x10xf32, #tpu.memory_space<vmem>>, vector<16x10xf32>
    %c0_1 = arith.constant 0 : index
    %c0_2 = arith.constant 0 : index
    %1 = vector.load %arg2[%c0_1, %c0_2] : memref<10x30xf32, #tpu.memory_space<vmem>>, vector<10x30xf32>
    %cst = arith.constant dense<0.000000e+00> : vector<16x30xf32>
    %2 = tpu.matmul %0, %1, %cst {dimension_numbers = #tpu.dot_dimension_numbers<[1], [0], [0], [1], [0, 0, 1, 1], [], []>} : vector<16x10xf32>, vector<10x30xf32>, vector<16x30xf32> -> vector<16x30xf32>
    %c0_3 = arith.constant 0 : index
    %c0_4 = arith.constant 0 : index
    %3 = vector.load %arg3[%c0_3, %c0_4] : memref<1x30xf32, #tpu.memory_space<vmem>>, vector<1x30xf32>
    %4 = vector.broadcast %3 : vector<1x30xf32> to vector<16x30xf32>
    %5 = arith.addf %2, %4 : vector<16x30xf32>
    %cst_5 = arith.constant 0.000000e+00 : f32
    %6 = vector.broadcast %cst_5 : f32 to vector<16x30xf32>
    %7 = arith.maximumf %5, %6 : vector<16x30xf32>
    %8 = math.absf %5 : vector<16x30xf32>
    %cst_6 = arith.constant 0.000000e+00 : f32
    %9 = vector.broadcast %cst_6 : f32 to vector<16x30xf32>
    %10 = arith.subf %9, %8 : vector<16x30xf32>
    %11 = math.exp %10 : vector<16x30xf32>
    %12 = math.log1p %11 : vector<16x30xf32>
    %13 = arith.addf %7, %12 : vector<16x30xf32>
    %c0_7 = arith.constant 0 : index
    %c0_8 = arith.constant 0 : index
    %14 = vector.load %arg4[%c0_7, %c0_8] : memref<30x30xf32, #tpu.memory_space<vmem>>, vector<30x30xf32>
    %cst_9 = arith.constant dense<0.000000e+00> : vector<16x30xf32>
    %15 = tpu.matmul %13, %14, %cst_9 {dimension_numbers = #tpu.dot_dimension_numbers<[1], [0], [0], [1], [0, 0, 1, 1], [], []>} : vector<16x30xf32>, vector<30x30xf32>, vector<16x30xf32> -> vector<16x30xf32>
    %c0_10 = arith.constant 0 : index
    %c0_11 = arith.constant 0 : index
    %16 = vector.load %arg5[%c0_10, %c0_11] : memref<1x30xf32, #tpu.memory_space<vmem>>, vector<1x30xf32>
    %17 = vector.broadcast %16 : vector<1x30xf32> to vector<16x30xf32>
    %18 = arith.addf %15, %17 : vector<16x30xf32>
    %cst_12 = arith.constant 0.000000e+00 : f32
    %19 = vector.broadcast %cst_12 : f32 to vector<16x30xf32>
    %20 = arith.maximumf %18, %19 : vector<16x30xf32>
    %21 = math.absf %18 : vector<16x30xf32>
    %cst_13 = arith.constant 0.000000e+00 : f32
    %22 = vector.broadcast %cst_13 : f32 to vector<16x30xf32>
    %23 = arith.subf %22, %21 : vector<16x30xf32>
    %24 = math.exp %23 : vector<16x30xf32>
    %25 = math.log1p %24 : vector<16x30xf32>
    %26 = arith.addf %20, %25 : vector<16x30xf32>
    %c0_14 = arith.constant 0 : index
    %c0_15 = arith.constant 0 : index
    %27 = vector.load %arg6[%c0_14, %c0_15] : memref<30x128xf32, #tpu.memory_space<vmem>>, vector<30x128xf32>
    %cst_16 = arith.constant dense<0.000000e+00> : vector<16x128xf32>
    %28 = tpu.matmul %26, %27, %cst_16 {dimension_numbers = #tpu.dot_dimension_numbers<[1], [0], [0], [1], [0, 0, 1, 1], [], []>} : vector<16x30xf32>, vector<30x128xf32>, vector<16x128xf32> -> vector<16x128xf32>
    %c0_17 = arith.constant 0 : index
    %c0_18 = arith.constant 0 : index
    %29 = vector.load %arg7[%c0_17, %c0_18] : memref<1x128xf32, #tpu.memory_space<vmem>>, vector<1x128xf32>
    %30 = vector.broadcast %29 : vector<1x128xf32> to vector<16x128xf32>
    %31 = arith.addf %28, %30 : vector<16x128xf32>
    %c0_19 = arith.constant 0 : index
    %c0_20 = arith.constant 0 : index
    %32 = vector.load %arg8[%c0_19, %c0_20] : memref<16x128xf32, #tpu.memory_space<vmem>>, vector<16x128xf32>
    tpu.vector_store %arg8[%c0_19, %c0_20], %31 {strides = array<i32>} : memref<16x128xf32, #tpu.memory_space<vmem>>, vector<16x128xf32>,
    return
  }
  func.func @transform_0(%arg0: i32) -> (i32, i32) {
    %c0_i32 = arith.constant 0 : i32
    %c0_i32_0 = arith.constant 0 : i32
    return %arg0, %c0_i32 : i32, i32
  }
  func.func @transform_1(%arg0: i32) -> (i32, i32) {
    %c0_i32 = arith.constant 0 : i32
    %c0_i32_0 = arith.constant 0 : i32
    %c0_i32_1 = arith.constant 0 : i32
    return %c0_i32, %c0_i32_0 : i32, i32
  }
  func.func @transform_2(%arg0: i32) -> (i32, i32) {
    %c0_i32 = arith.constant 0 : i32
    %c0_i32_0 = arith.constant 0 : i32
    %c0_i32_1 = arith.constant 0 : i32
    return %c0_i32, %c0_i32_0 : i32, i32
  }
  func.func @transform_3(%arg0: i32) -> (i32, i32) {
    %c0_i32 = arith.constant 0 : i32
    %c0_i32_0 = arith.constant 0 : i32
    %c0_i32_1 = arith.constant 0 : i32
    return %c0_i32, %c0_i32_0 : i32, i32
  }
  func.func @transform_4(%arg0: i32) -> (i32, i32) {
    %c0_i32 = arith.constant 0 : i32
    %c0_i32_0 = arith.constant 0 : i32
    %c0_i32_1 = arith.constant 0 : i32
    return %c0_i32, %c0_i32_0 : i32, i32
  }
  func.func @transform_5(%arg0: i32) -> (i32, i32) {
    %c0_i32 = arith.constant 0 : i32
    %c0_i32_0 = arith.constant 0 : i32
    %c0_i32_1 = arith.constant 0 : i32
    return %c0_i32, %c0_i32_0 : i32, i32
  }
  func.func @transform_6(%arg0: i32) -> (i32, i32) {
    %c0_i32 = arith.constant 0 : i32
    %c0_i32_0 = arith.constant 0 : i32
    %c0_i32_1 = arith.constant 0 : i32
    return %c0_i32, %c0_i32_0 : i32, i32
  }
  func.func @transform_7(%arg0: i32) -> (i32, i32) {
    %c0_i32 = arith.constant 0 : i32
    %c0_i32_0 = arith.constant 0 : i32
    return %arg0, %c0_i32 : i32, i32
  }
}

</mosaic_0001>

<llo_original>
// kernel: decoder_forward.1
$region0: #{decoder_forward.1}
  #allocation0 [shape = 'u32[]', space=smem, size = 0x4, offset = 0x4, fixed_abs, tag = 'smem constant byte address 0x4 - core index']
  #allocation1 [shape = 'u32[72,128]{1,0:T(1,128)}', space=vmem, size = 0x9000, scoped, tag = 'internal scratch']
  %s0 = inlined_call_operand.vmem [shape: f32[16,10], index: 0, kind: input, shape index: {}]
  %s1 = inlined_call_operand.vmem [shape: f32[10,30], index: 1, kind: input, shape index: {}]
  %s2 = inlined_call_operand.vmem [shape: f32[1,30], index: 2, kind: input, shape index: {}]
  %s3 = inlined_call_operand.vmem [shape: f32[30,30], index: 3, kind: input, shape index: {}]
  %s4 = inlined_call_operand.vmem [shape: f32[1,30], index: 4, kind: input, shape index: {}]
  %s5 = inlined_call_operand.vmem [shape: f32[30,128], index: 5, kind: input, shape index: {}]
  %s6 = inlined_call_operand.vmem [shape: f32[1,128], index: 6, kind: input, shape index: {}]
  %s7 = inlined_call_operand.vmem [shape: f32[16,128], index: 7, kind: output, shape index: {}]
  %s8 = sld [smem:[#allocation0]]
  $region38: #{decoder_forward.1} parent=0
    _
  %s10 = ssub.s32 1, %s8
  %s11 = scalar_select 0, %s10, %s8
  // Predicated region
  $region2: #{decoder_forward.1} parent=0 // pred_check
    _
  $region3: #{decoder_forward.1} parent=0 // pred_check_branch
    %13 = sbr.rel (0) target = $region5
  $region4: #{decoder_forward.1} parent=0 // pred_region
    _
  $region5: #{decoder_forward.1} parent=0 // pred_fallthru
    _
  // Predicated region
  $region6: #{decoder_forward.1} parent=0 // pred_check
    _
  $region7: #{decoder_forward.1} parent=0 // pred_check_branch
    %15 = sbr.rel (0) target = $region9
  $region8: #{decoder_forward.1} parent=0 // pred_region
    _
  $region9: #{decoder_forward.1} parent=0 // pred_fallthru
    _
  // Predicated region
  $region10: #{decoder_forward.1} parent=0 // pred_check
    _
  $region11: #{decoder_forward.1} parent=0 // pred_check_branch
    %17 = sbr.rel (0) target = $region13
  $region12: #{decoder_forward.1} parent=0 // pred_region
    _
  $region13: #{decoder_forward.1} parent=0 // pred_fallthru
    _
  // Predicated region
  $region14: #{decoder_forward.1} parent=0 // pred_check
    _
  $region15: #{decoder_forward.1} parent=0 // pred_check_branch
    %19 = sbr.rel (0) target = $region17
  $region16: #{decoder_forward.1} parent=0 // pred_region
    _
  $region17: #{decoder_forward.1} parent=0 // pred_fallthru
    _
  // Predicated region
  $region18: #{decoder_forward.1} parent=0 // pred_check
    _
  $region19: #{decoder_forward.1} parent=0 // pred_check_branch
    %21 = sbr.rel (0) target = $region21
  $region20: #{decoder_forward.1} parent=0 // pred_region
    _
  $region21: #{decoder_forward.1} parent=0 // pred_fallthru
    _
  // Predicated region
  $region22: #{decoder_forward.1} parent=0 // pred_check
    _
  $region23: #{decoder_forward.1} parent=0 // pred_check_branch
    %23 = sbr.rel (0) target = $region25
  $region24: #{decoder_forward.1} parent=0 // pred_region
    _
  $region25: #{decoder_forward.1} parent=0 // pred_fallthru
    _
  // Predicated region
  $region26: #{decoder_forward.1} parent=0 // pred_check
    _
  $region27: #{decoder_forward.1} parent=0 // pred_check_branch
    %25 = sbr.rel (0) target = $region29
  $region28: #{decoder_forward.1} parent=0 // pred_region
    _
  $region29: #{decoder_forward.1} parent=0 // pred_fallthru
    _
  %v26 = vld [vmem:[%s0] sm:$0xff]
  %v27 = vld [vmem:[%s0 + $0x8] sm:$0xff]
  %v28 = vld [vmem:[%s1] sm:$0xff]
  %v29 = vld [vmem:[%s1 + $0x8] sm:$0x3]
  %v30 = vld [vmem:[%s2] sm:$0x1]
  %v32 = vperm.slane %v30, 0
  %vm34 = vcmask 80896
  %v36 = vsel %vm34, %v26, 0
  %v39 = vsel %vm34, %v27, 0
  %vm41 = vcmask 1041408
  %v43 = vsel %vm41, %v29, 0
  %45 = vmatpush.msra.mxu0 0.0
  %46 = vmatpush.msra.mxu0 0.0
  %47 = vmatpush.msra.mxu0 0.0
  %48 = vmatpush.msra.mxu0 0.0
  %49 = vmatpush.msra.mxu0 0.0
  %50 = vmatpush.msra.mxu0 0.0
  %51 = vmatpush.msra.mxu0 0.0
  %52 = vmatpush.msra.mxu0 0.0
  %53 = vmatpush.msra.mxu0 0.0
  %54 = vmatpush.msra.mxu0 0.0
  %55 = vmatpush.msra.mxu0 0.0
  %56 = vmatpush.msra.mxu0 0.0
  %57 = vmatpush.msra.mxu0 0.0
  %58 = vmatpush.msra.mxu0 0.0
  %59 = vmatpush.msra.mxu0 %v43
  %60 = vmatpush.msra.mxu0 %v28
  %61 = vmatmul.f32.gmra.mxu0 %v36
  %v62 = vpop.f32.mrf.mxu0
  %v63 = vadd.f32 %v32, %v62
  %64 = vmatmul.f32.gmra.mxu0 %v39
  %v65 = vpop.f32.mrf.mxu0
  %v66 = vadd.f32 %v32, %v65
  %67 = vdwg.mxu0
  %v68 = vmax.f32 %v63, 0.0
  %v69 = vmax.f32 %v66, 0.0
  %v70 = vand.u32 2147483647, %v63
  %v71 = vand.u32 2147483647, %v66
  %v72 = vsub.f32 0.0, %v70
  %v73 = vsub.f32 0.0, %v71
  %v74 = vmul.f32 %v72, 1.442695
  %v75 = vpow.pop %v74
  %v76 = vmul.f32 %v73, 1.442695
  %v77 = vpow.pop %v76
  %v78 = vadd.f32 %v75, 1.0
  %v79 = vlog2.pop %v78
  %v80 = vmul.f32 %v79, 0.6931472
  %v81 = vmul.f32 -0.5, %v75
  %v82 = vadd.f32 %v81, 1.0
  %v83 = vmul.f32 %v82, %v75
  %v84 = vand.u32 2147483647, %v75
  %vm85 = vcmp.lt.f32.partialorder %v84, 0.0004427343
  %v86 = vsel %vm85, %v83, %v80
  %v87 = vadd.f32 %v77, 1.0
  %v88 = vlog2.pop %v87
  %v89 = vmul.f32 %v88, 0.6931472
  %v90 = vmul.f32 -0.5, %v77
  %v91 = vadd.f32 %v90, 1.0
  %v92 = vmul.f32 %v91, %v77
  %v93 = vand.u32 2147483647, %v77
  %vm94 = vcmp.lt.f32.partialorder %v93, 0.0004427343
  %v95 = vsel %vm94, %v92, %v89
  %v96 = vadd.f32 %v68, %v86
  %v97 = vadd.f32 %v69, %v95
  %v98 = vld [vmem:[%s3] sm:$0xff]
  %v99 = vld [vmem:[%s3 + $0x8] sm:$0xff]
  %v100 = vld [vmem:[%s3 + $0x10] sm:$0xff]
  %v101 = vld [vmem:[%s3 + $0x18] sm:$0x3f]
  %v102 = vld [vmem:[%s4] sm:$0x1]
  %v104 = vperm.slane %v102, 0
  %vm106 = vcmask 244736
  %v108 = vsel %vm106, %v96, 0
  %v111 = vsel %vm106, %v97, 0
  %vm113 = vcmask 1045504
  %v115 = vsel %vm113, %v101, 0
  %117 = vmatpush.msra.mxu0 0.0
  %118 = vmatpush.msra.mxu0 0.0
  %119 = vmatpush.msra.mxu0 0.0
  %120 = vmatpush.msra.mxu0 0.0
  %121 = vmatpush.msra.mxu0 0.0
  %122 = vmatpush.msra.mxu0 0.0
  %123 = vmatpush.msra.mxu0 0.0
  %124 = vmatpush.msra.mxu0 0.0
  %125 = vmatpush.msra.mxu0 0.0
  %126 = vmatpush.msra.mxu0 0.0
  %127 = vmatpush.msra.mxu0 0.0
  %128 = vmatpush.msra.mxu0 0.0
  %129 = vmatpush.msra.mxu0 %v115
  %130 = vmatpush.msra.mxu0 %v100
  %131 = vmatpush.msra.mxu0 %v99
  %132 = vmatpush.msra.mxu0 %v98
  %133 = vmatmul.f32.gmra.mxu0 %v108
  %v134 = vpop.f32.mrf.mxu0
  %v135 = vadd.f32 %v104, %v134
  %136 = vmatmul.f32.gmra.mxu0 %v111
  %v137 = vpop.f32.mrf.mxu0
  %v138 = vadd.f32 %v104, %v137
  %139 = vdwg.mxu0
  %v140 = vmax.f32 %v135, 0.0
  %v141 = vmax.f32 %v138, 0.0
  %v142 = vand.u32 2147483647, %v135
  %v143 = vand.u32 2147483647, %v138
  %v144 = vsub.f32 0.0, %v142
  %v145 = vsub.f32 0.0, %v143
  %v146 = vmul.f32 %v144, 1.442695
  %v147 = vpow.pop %v146
  %v148 = vmul.f32 %v145, 1.442695
  %v149 = vpow.pop %v148
  %v150 = vadd.f32 %v147, 1.0
  %v151 = vlog2.pop %v150
  %v152 = vmul.f32 %v151, 0.6931472
  %v153 = vmul.f32 -0.5, %v147
  %v154 = vadd.f32 %v153, 1.0
  %v155 = vmul.f32 %v154, %v147
  %v156 = vand.u32 2147483647, %v147
  %vm157 = vcmp.lt.f32.partialorder %v156, 0.0004427343
  %v158 = vsel %vm157, %v155, %v152
  %v159 = vadd.f32 %v149, 1.0
  %v160 = vlog2.pop %v159
  %v161 = vmul.f32 %v160, 0.6931472
  %v162 = vmul.f32 -0.5, %v149
  %v163 = vadd.f32 %v162, 1.0
  %v164 = vmul.f32 %v163, %v149
  %v165 = vand.u32 2147483647, %v149
  %vm166 = vcmp.lt.f32.partialorder %v165, 0.0004427343
  %v167 = vsel %vm166, %v164, %v161
  %v168 = vadd.f32 %v140, %v158
  %v169 = vadd.f32 %v141, %v167
  %v170 = vld [vmem:[%s5] sm:$0xff]
  %v171 = vld [vmem:[%s5 + $0x8] sm:$0xff]
  %v172 = vld [vmem:[%s5 + $0x10] sm:$0xff]
  %v173 = vld [vmem:[%s5 + $0x18] sm:$0x3f]
  %v174 = vld [vmem:[%s6] sm:$0x1]
  %v176 = vperm.slane %v174, 0
  %v179 = vsel %vm106, %v168, 0
  %v182 = vsel %vm106, %v169, 0
  %v185 = vsel %vm113, %v173, 0
  %187 = vmatpush.msra.mxu0 0.0
  %188 = vmatpush.msra.mxu0 0.0
  %189 = vmatpush.msra.mxu0 0.0
  %190 = vmatpush.msra.mxu0 0.0
  %191 = vmatpush.msra.mxu0 0.0
  %192 = vmatpush.msra.mxu0 0.0
  %193 = vmatpush.msra.mxu0 0.0
  %194 = vmatpush.msra.mxu0 0.0
  %195 = vmatpush.msra.mxu0 0.0
  %196 = vmatpush.msra.mxu0 0.0
  %197 = vmatpush.msra.mxu0 0.0
  %198 = vmatpush.msra.mxu0 0.0
  %199 = vmatpush.msra.mxu0 %v185
  %200 = vmatpush.msra.mxu0 %v172
  %201 = vmatpush.msra.mxu0 %v171
  %202 = vmatpush.msra.mxu0 %v170
  %203 = vmatmul.f32.gmra.mxu0 %v179
  %v204 = vpop.f32.mrf.mxu0
  %v205 = vadd.f32 %v176, %v204
  %206 = vmatmul.f32.gmra.mxu0 %v182
  %v207 = vpop.f32.mrf.mxu0
  %v208 = vadd.f32 %v176, %v207
  %209 = vdwg.mxu0
  %210 = vst [vmem:[%s7] sm:$0xff] %v205
  %211 = vst [vmem:[%s7 + $0x8] sm:$0xff] %v208
  // Predicated region
  $region30: #{decoder_forward.1} parent=0 // pred_check
    _
  $region31: #{decoder_forward.1} parent=0 // pred_check_branch
    %213 = sbr.rel (0) target = $region33
  $region32: #{decoder_forward.1} parent=0 // pred_region
    _
  $region33: #{decoder_forward.1} parent=0 // pred_fallthru
    _
  // Predicated region
  $region34: #{decoder_forward.1} parent=0 // pred_check
    _
  $region35: #{decoder_forward.1} parent=0 // pred_check_branch
    %215 = sbr.rel (0) target = $region37
  $region36: #{decoder_forward.1} parent=0 // pred_region
    _
  $region37: #{decoder_forward.1} parent=0 // pred_fallthru
    _

</llo_original>
